<compile_context>
chip_gen: v5e
topology: v5e:2x2
jax: 0.10.0
libtpu: 0.0.40
codegen_flags: <defaults>
</compile_context>

<pallas_src>
import functools

import jax
import jax.numpy as jnp
from jax import lax
from jax.experimental import pallas as pl
from jax.experimental.pallas import tpu as pltpu


def _dropout_linear_kernel(seed_ref, x_ref, w_ref, b_ref, o_ref, *,
                           dropout_rate: float, training: bool,
                           tile_n: int, use_hw_prng: bool):
    # x_ref : (tile_n, R) refs tile in its native dtype (e.g. bf16), VMEM
    # w_ref : (1, R)      f32 weight row, VMEM
    # seed_ref, b_ref : (1,) scalars in SMEM
    # o_ref : (tile_n, 1) f32 output column, VMEM
    x = x_ref[...].astype(jnp.float32)          # cast in-register, not in HBM

    if training and dropout_rate > 0.0:
        keep_thresh = jnp.uint32(
            min(int((1.0 - dropout_rate) * 4294967296.0), 0xFFFFFFFF))
        if use_hw_prng:
            # TPU hardware PRNG; decorrelate the stream per grid tile.
            pltpu.prng_seed(seed_ref[0] + pl.program_id(0))
            bits = pltpu.bitcast(pltpu.prng_random_bits(x.shape), jnp.uint32)
        else:
            # Portable counter-based hash PRNG (works under CPU interpret mode).
            # Unique global element index -> 32-bit avalanche hash.
            r = x.shape[1]
            rows = lax.broadcasted_iota(jnp.int32, x.shape, 0) \
                   + pl.program_id(0) * tile_n
            cols = lax.broadcasted_iota(jnp.int32, x.shape, 1)
            h = (rows * r + cols).astype(jnp.uint32)
            h = h + seed_ref[0].astype(jnp.uint32) * jnp.uint32(0x9E3779B9)
            h = h ^ (h >> 16)
            h = h * jnp.uint32(0x7FEB352D)
            h = h ^ (h >> 15)
            h = h * jnp.uint32(0x846CA68B)
            h = h ^ (h >> 16)
            bits = h
        keep = bits < keep_thresh                       # P(keep) = 1 - p
        scale = jnp.float32(1.0 / (1.0 - dropout_rate))  # inverted dropout
        x = jnp.where(keep, x * scale, jnp.float32(0.0))

    w = w_ref[...]                                   # (1, R), broadcasts over rows
    y = jnp.sum(x * w, axis=-1, keepdims=True)       # (tile_n, 1) lane reduction
    o_ref[...] = y + b_ref[0]


def reference_model_forward(refs, weight, bias, seed=0, *,
                            dropout_rate: float, training: bool = False,
                            tile_n: int = 8192, use_hw_prng=None):
    """refs: (N, ref_cnt) any real dtype; weight: (1, ref_cnt); bias: (1,).
    Returns (N,) float32 — equivalent to ReferenceModel.forward."""
    N, R = refs.shape
    if use_hw_prng is None:
        # Hardware PRNG only lowers under the real Mosaic TPU pipeline.
        use_hw_prng = (jax.default_backend() == "tpu")

    if N <= tile_n:
        tile_n = N                      # single full-array block
    else:
        # Multi-tile: tile_n must satisfy the (8,128)-style block constraints.
        assert tile_n % 128 == 0, "tile_n must be a multiple of 128 when tiling"
    num_tiles = pl.cdiv(N, tile_n)      # ragged last tile handled by Pallas

    w2 = weight.reshape(1, R).astype(jnp.float32)
    b1 = bias.reshape(1).astype(jnp.float32)
    seed_arr = jnp.asarray([seed], dtype=jnp.int32)

    kernel = functools.partial(
        _dropout_linear_kernel,
        dropout_rate=float(dropout_rate),
        training=bool(training),
        tile_n=int(tile_n),
        use_hw_prng=bool(use_hw_prng),
    )

    out = pl.pallas_call(
        kernel,
        out_shape=jax.ShapeDtypeStruct((N, 1), jnp.float32),
        grid=(num_tiles,),
        in_specs=[
            pl.BlockSpec(memory_space=pltpu.SMEM),           # seed scalar (1,)
            pl.BlockSpec((tile_n, R), lambda i: (i, 0)),      # refs row-tile
            pl.BlockSpec((1, R), lambda i: (0, 0)),           # weight row (resident)
            pl.BlockSpec(memory_space=pltpu.SMEM),           # bias scalar (1,)
        ],
        out_specs=pl.BlockSpec((tile_n, 1), lambda i: (i, 0)),
        compiler_params=pltpu.CompilerParams(
            dimension_semantics=("parallel",)),               # v7x: 2 TCs share tiles
    )(seed_arr, refs, w2, b1)

    return out[:, 0]                     # torch.squeeze(pred, dim=1)


if __name__ == "__main__":
    # Module hyperparameters (synthetic, deterministic init — no checkpoint load).
    dropout_rate = 0.5
    ref_cnt = 32
    N = 8                                # small batch of reference scores

    key = jax.random.PRNGKey(0)
    k_x, k_w, k_b, k_x2 = jax.random.split(key, 4)

    # Inputs: module casts to float32 internally; feed bf16 to exercise that path.
    refs = jax.random.normal(k_x, (N, ref_cnt), dtype=jnp.bfloat16)

    # nn.Linear(ref_cnt, 1) default init: U(-1/sqrt(in), 1/sqrt(in)) for W and b.
    bound = 1.0 / (ref_cnt ** 0.5)
    weight = jax.random.uniform(k_w, (1, ref_cnt), minval=-bound, maxval=bound,
                                dtype=jnp.float32)
    bias = jax.random.uniform(k_b, (1,), minval=-bound, maxval=bound,
                              dtype=jnp.float32)

    # ---- Eval mode (dropout = identity): check against a pure-JAX reference. ----
    out_eval = reference_model_forward(refs, weight, bias,
                                       dropout_rate=dropout_rate, training=False)
    jax.block_until_ready(out_eval)
    ref_eval = jnp.sum(refs.astype(jnp.float32) * weight, axis=-1) + bias[0]
    assert out_eval.shape == (N,)
    assert jnp.allclose(out_eval, ref_eval, atol=1e-5, rtol=1e-5)

    # ---- Multi-tile eval run (exercise the grid / pipelined path, ragged tail). ----
    N2 = 300
    refs2 = jax.random.normal(k_x2, (N2, ref_cnt), dtype=jnp.bfloat16)
    out2 = reference_model_forward(refs2, weight, bias,
                                   dropout_rate=dropout_rate, training=False,
                                   tile_n=128)
    jax.block_until_ready(out2)
    ref2 = jnp.sum(refs2.astype(jnp.float32) * weight, axis=-1) + bias[0]
    assert out2.shape == (N2,)
    assert jnp.allclose(out2, ref2, atol=1e-5, rtol=1e-5)

    # ---- Training mode (in-kernel dropout, inverted 1/(1-p) scaling). ----
    out_train = reference_model_forward(refs, weight, bias, seed=1234,
                                        dropout_rate=dropout_rate, training=True)
    jax.block_until_ready(out_train)
    assert out_train.shape == (N,)
    assert bool(jnp.all(jnp.isfinite(out_train)))
    # Dropout should actually perturb the linear output at p=0.5.
    assert not bool(jnp.allclose(out_train, out_eval))

    print("KERNEL_OK")
</pallas_src>

<mosaic_0001>
module attributes {stable_mosaic.version = 11 : i64} {
  func.func @_dropout_linear_kernel(%arg0: i32, %arg1: memref<1xi32, #tpu.memory_space<smem>>, %arg2: memref<8x32xbf16, #tpu.memory_space<vmem>>, %arg3: memref<1x32xf32, #tpu.memory_space<vmem>>, %arg4: memref<1xf32, #tpu.memory_space<smem>>, %arg5: memref<8x1xf32, #tpu.memory_space<vmem>>) attributes {dimension_semantics = [#tpu.dimension_semantics<parallel>], iteration_bounds = array<i64: 1>, scalar_prefetch = 0 : i64, scratch_operands = 0 : i64, tpu.core_type = #tpu.core_type<tc>, window_params = [{transform_indices = @transform_0, window_bounds = array<i64: 1>}, {transform_indices = @transform_1, window_bounds = array<i64: 8, 32>}, {pipeline_mode = #tpu.pipeline_mode<synchronous>, transform_indices = @transform_2, window_bounds = array<i64: 1, 32>}, {transform_indices = @transform_3, window_bounds = array<i64: 1>}, {transform_indices = @transform_4, window_bounds = array<i64: 8, 1>}]} {
    %c0 = arith.constant 0 : index
    %c0_0 = arith.constant 0 : index
    %0 = vector.load %arg2[%c0, %c0_0] : memref<8x32xbf16, #tpu.memory_space<vmem>>, vector<8x32xbf16>
    %1 = arith.extf %0 : vector<8x32xbf16> to vector<8x32xf32>
    %c0_1 = arith.constant 0 : index
    %c0_2 = arith.constant 0 : index
    %2 = vector.load %arg3[%c0_1, %c0_2] : memref<1x32xf32, #tpu.memory_space<vmem>>, vector<1x32xf32>
    %3 = vector.broadcast %2 : vector<1x32xf32> to vector<8x32xf32>
    %4 = arith.mulf %1, %3 : vector<8x32xf32>
    %cst = arith.constant dense<0.000000e+00> : vector<8xf32>
    %5 = vector.multi_reduction <add>, %4, %cst [1] : vector<8x32xf32> to vector<8xf32>
    %6 = vector.shape_cast %5 : vector<8xf32> to vector<8x1xf32>
    %c0_3 = arith.constant 0 : index
    %7 = memref.load %arg4[%c0_3] : memref<1xf32, #tpu.memory_space<smem>>
    %8 = vector.broadcast %7 : f32 to vector<8x1xf32>
    %9 = arith.addf %6, %8 : vector<8x1xf32>
    %c0_4 = arith.constant 0 : index
    %c0_5 = arith.constant 0 : index
    %10 = vector.load %arg5[%c0_4, %c0_5] : memref<8x1xf32, #tpu.memory_space<vmem>>, vector<8x1xf32>
    tpu.vector_store %arg5[%c0_4, %c0_5], %9 {strides = array<i32>} : memref<8x1xf32, #tpu.memory_space<vmem>>, vector<8x1xf32>,
    return
  }
  func.func @transform_0(%arg0: i32) -> i32 {
    %c0_i32 = arith.constant 0 : i32
    %c0_i32_0 = arith.constant 0 : i32
    return %c0_i32 : i32
  }
  func.func @transform_1(%arg0: i32) -> (i32, i32) {
    %c0_i32 = arith.constant 0 : i32
    %c0_i32_0 = arith.constant 0 : i32
    return %arg0, %c0_i32 : i32, i32
  }
  func.func @transform_2(%arg0: i32) -> (i32, i32) {
    %c0_i32 = arith.constant 0 : i32
    %c0_i32_0 = arith.constant 0 : i32
    %c0_i32_1 = arith.constant 0 : i32
    return %c0_i32, %c0_i32_0 : i32, i32
  }
  func.func @transform_3(%arg0: i32) -> i32 {
    %c0_i32 = arith.constant 0 : i32
    %c0_i32_0 = arith.constant 0 : i32
    return %c0_i32 : i32
  }
  func.func @transform_4(%arg0: i32) -> (i32, i32) {
    %c0_i32 = arith.constant 0 : i32
    %c0_i32_0 = arith.constant 0 : i32
    return %arg0, %c0_i32 : i32, i32
  }
}

</mosaic_0001>

<llo_original>
// kernel: tpu_custom_call.1
$region0: #{tpu_custom_call.1}
  #allocation0 [shape = 'u32[]', space=smem, size = 0x4, offset = 0x4, fixed_abs, tag = 'smem constant byte address 0x4 - core index']
  #allocation1 [shape = 'u32[72,128]{1,0:T(1,128)}', space=vmem, size = 0x9000, scoped, tag = 'internal scratch']
  #allocation2 [shape = 's32[1]{0:T(128)S(6)}', space=smem, size = 0x200, scoped, tag = 'scoped memory for tpu_custom_call.1']
  #allocation3 [shape = 'f32[1]{0:T(128)S(6)}', space=smem, size = 0x200, scoped, tag = 'scoped memory for tpu_custom_call.1']
  %s0 = inlined_call_operand.<no memory space> [shape: s32[1], index: 0, kind: input, shape index: {}]
  %s1 = inlined_call_operand.vmem [shape: bf16[8,32], index: 1, kind: input, shape index: {}]
  %s2 = inlined_call_operand.hbm [shape: f32[1,32], index: 2, kind: input, shape index: {}]
  %s3 = inlined_call_operand.<no memory space> [shape: f32[1], index: 3, kind: input, shape index: {}]
  %s4 = inlined_call_operand.vmem [shape: f32[8,1], index: 4, kind: output, shape index: {}]
  %s5 = sld [smem:[#allocation0]]
  $region30: #{tpu_custom_call.1} parent=0
    _
  %s7 = ssub.s32 1, %s5
  %s8 = scalar_select 0, %s7, %s5
  %9 = sst [smem:[#allocation2]] %s0
  %10 = sst [smem:[#allocation3]] %s3
  $region1: #{tpu_custom_call.1} parent=0
    #allocation4 [shape = 'u8[512]{0}', space=vmem, size = 0x400, scoped, tag = 'input window, operand 2, single buffered']
    #allocation5 [shape = 's32[1]{0}', space=sflag, size = 0x4, scoped, tag = 'scoped memory for tpu_custom_call.1']
    %11 = vsyncpa [#allocation5], 0
    // Predicated region
    $region2: #{tpu_custom_call.1} parent=1 // pred_check
      _
    $region3: #{tpu_custom_call.1} parent=1 // pred_check_branch
      %13 = sbr.rel (0) target = $region5
    $region4: #{tpu_custom_call.1} parent=1 // pred_region
      _
    $region5: #{tpu_custom_call.1} parent=1 // pred_fallthru
      _
    // Predicated region
    $region6: #{tpu_custom_call.1} parent=1 // pred_check
      _
    $region7: #{tpu_custom_call.1} parent=1 // pred_check_branch
      %15 = sbr.rel (0) target = $region9
    $region8: #{tpu_custom_call.1} parent=1 // pred_region
      _
    $region9: #{tpu_custom_call.1} parent=1 // pred_fallthru
      _
    // Predicated region
    $region10: #{tpu_custom_call.1} parent=1 // pred_check
      _
    $region11: #{tpu_custom_call.1} parent=1 // pred_check_branch
      %17 = sbr.rel (0) target = $region13
    $region12: #{tpu_custom_call.1} parent=1 // pred_region
      %19 = vsyncadd [#allocation5], 0
      %s21 = sshll.u32 %s2, 4
      %s22 = int_to_ptr.hbm [resolvable:$true] %s21
      %s23 = sshll.u32 [#allocation4], 4
      %s24 = int_to_ptr.vmem [resolvable:$true] %s23
      %26 = dma.hbm_to_vmem [thread:$0]  %s22, 16, %s24, [#allocation5]
    $region13: #{tpu_custom_call.1} parent=1 // pred_fallthru
      _
    // Predicated region
    $region14: #{tpu_custom_call.1} parent=1 // pred_check
      _
    $region15: #{tpu_custom_call.1} parent=1 // pred_check_branch
      %28 = sbr.rel (0) target = $region17
    $region16: #{tpu_custom_call.1} parent=1 // pred_region
      _
    $region17: #{tpu_custom_call.1} parent=1 // pred_fallthru
      _
    // Predicated region
    $region18: #{tpu_custom_call.1} parent=1 // pred_check
      _
    $region19: #{tpu_custom_call.1} parent=1 // pred_check_branch
      %30 = sbr.rel (0) target = $region21
    $region20: #{tpu_custom_call.1} parent=1 // pred_region
      %32 = dma.done [#allocation5], 16
    $region21: #{tpu_custom_call.1} parent=1 // pred_fallthru
      _
    %v33 = vld [vmem:[%s1] sm:$0xf]
    %v34 = vunpack.c.l.bf16 %v33
    %v35 = vld [vmem:[#allocation4] sm:$0x1]
    %v37 = vperm.slane %v35, 0
    %v39 = vmul.f32 %v34, %v37
    %vm40 = vcmask 261120
    %v41 = vsel %vm40, %v39, 0.0
    %42 = vadd.xlane.f32.xlu0 %v41
    %v43 = vpop.xlane.xlu0 %42
    %s44 = sld [smem:[#allocation3]]
    %v45 = vstv %s44
    %v46 = vadd.f32 %v43, %v45
    %vm47 = vcmask 7168
    %48 = vst.msk [vmem:[%s4] sm:$0xff] %vm47, %v46
    // Predicated region
    $region22: #{tpu_custom_call.1} parent=1 // pred_check
      _
    $region23: #{tpu_custom_call.1} parent=1 // pred_check_branch
      %50 = sbr.rel (0) target = $region25
    $region24: #{tpu_custom_call.1} parent=1 // pred_region
      _
    $region25: #{tpu_custom_call.1} parent=1 // pred_fallthru
      _
    // Predicated region
    $region26: #{tpu_custom_call.1} parent=1 // pred_check
      _
    $region27: #{tpu_custom_call.1} parent=1 // pred_check_branch
      %52 = sbr.rel (0) target = $region29
    $region28: #{tpu_custom_call.1} parent=1 // pred_region
      _
    $region29: #{tpu_custom_call.1} parent=1 // pred_fallthru
      _
    %53 = vsyncpa [#allocation5], 1

</llo_original>
